<compile_context>
chip_gen: v7x
topology: tpu7x:2x2x1
jax: 0.10.0
libtpu: 0.0.40
codegen_flags: <defaults>
</compile_context>

<pallas_src>
import jax
import jax.numpy as jnp
from jax.experimental import pallas as pl


def _mha_kernel(x_ref, wqkv_ref, bqkv_ref, o_ref):
    """Whole problem in one invocation.

    x_ref    : (B, S, D)  f32 input
    wqkv_ref : (3, D, D)  fused q/k/v weight, PyTorch (out, in) layout, bf16,
                          1/sqrt(D) pre-folded into slot 0 (q)
    bqkv_ref : (3, 1, D)  fused q/k/v bias, f32, 1/sqrt(D) pre-folded into slot 0
    o_ref    : (B, S, D)  output
    """
    b, s, d = x_ref.shape

    # Flatten batch into the M dimension for the projections (leading-axis merge,
    # no relayout), cast once to bf16 for the MXU.
    x2 = x_ref[...].reshape(b * s, d).astype(jnp.bfloat16)        # (B*S, D)

    def proj(i):
        # wqkv_ref[i] is a free leading-axis index -> (D, D) in (out, in) layout.
        # Contract last dims (trans-B semantics): no transpose, no XLU traffic.
        y = jax.lax.dot_general(
            x2, wqkv_ref[i],
            dimension_numbers=(((1,), (1,)), ((), ())),
            preferred_element_type=jnp.float32,
        )                                                         # (B*S, D) f32
        return (y + bqkv_ref[i]).reshape(b, s, d)                 # (B, S, D) f32

    q = proj(0).astype(jnp.bfloat16)   # scale already folded into slot 0
    k = proj(1).astype(jnp.bfloat16)
    v = proj(2)                        # keep f32 for the second matmul

    # scores = (q / sqrt(D)) @ k^T  — contraction on last dims, no k transpose.
    attn = jnp.einsum("bsd,btd->bst", q, k,
                      preferred_element_type=jnp.float32)         # (B, S, S) f32

    # out = scores @ v   (intended meaning of the buggy `attn_weight @ v_update(1, 2)`).
    # attn kept in f32: without softmax the raw scores grow with D and a bf16
    # cast here was the dominant numerical error.
    out = jnp.einsum("bst,btd->bsd", attn, v,
                     preferred_element_type=jnp.float32)          # (B, S, D) f32
    o_ref[...] = out.astype(o_ref.dtype)


def fuse_qkv_params(wq, bq, wk, bk, wv, bv):
    """One-time parameter fusion — call at parameter-load time, NOT per forward.

    Stacks the three (D, D) PyTorch-layout weights into (3, D, D) bf16 and the
    biases into (3, 1, D) f32, folding 1/sqrt(D) into the q slot.
    """
    d = wq.shape[0]
    inv_sqrt_d = float(d) ** -0.5
    w_qkv = jnp.stack([wq * inv_sqrt_d, wk, wv], axis=0).astype(jnp.bfloat16)
    b_qkv = jnp.stack([bq * inv_sqrt_d, bk, bv], axis=0).reshape(3, 1, d)
    return w_qkv, b_qkv  # (3, D, D) bf16, (3, 1, D) f32


@jax.jit
def mh_attention(x, w_qkv, b_qkv):
    """x: (B, S, D) f32.  w_qkv/b_qkv: from fuse_qkv_params."""
    B, S, D = x.shape
    # Single invocation: no grid.  Whole arrays are the blocks (full-dim block
    # shapes are exempt from the (8,128) divisibility rule).
    return pl.pallas_call(
        _mha_kernel,
        out_shape=jax.ShapeDtypeStruct((B, S, D), x.dtype),
        in_specs=[
            pl.BlockSpec((B, S, D), lambda: (0, 0, 0)),
            pl.BlockSpec((3, D, D), lambda: (0, 0, 0)),
            pl.BlockSpec((3, 1, D), lambda: (0, 0, 0)),
        ],
        out_specs=pl.BlockSpec((B, S, D), lambda: (0, 0, 0)),
    )(x, w_qkv, b_qkv)


def _torch_linear_init(key, out_features, in_features):
    """Deterministic analogue of torch.nn.Linear default init."""
    kw, kb = jax.random.split(key)
    bound = 1.0 / (in_features ** 0.5)
    w = jax.random.uniform(kw, (out_features, in_features),
                           minval=-bound, maxval=bound, dtype=jnp.float32)
    b = jax.random.uniform(kb, (out_features,),
                           minval=-bound, maxval=bound, dtype=jnp.float32)
    return w, b


if __name__ == "__main__":
    # cfg: context_length == emb_dim == 32 (required for the shapes to line up)
    B, S, D = 2, 8, 32

    key = jax.random.PRNGKey(0)
    kx, kq, kk, kv = jax.random.split(key, 4)

    x = jax.random.normal(kx, (B, S, D), dtype=jnp.float32)
    wq, bq = _torch_linear_init(kq, D, D)
    wk, bk = _torch_linear_init(kk, D, D)
    wv, bv = _torch_linear_init(kv, D, D)

    # One-time fusion (parameter-load time), then the per-call path is just the kernel.
    w_qkv, b_qkv = fuse_qkv_params(wq, bq, wk, bk, wv, bv)

    out = mh_attention(x, w_qkv, b_qkv)
    out = jax.block_until_ready(out)

    # Pure-JAX f32 reference of the same (intended) math.  Tolerance is loose
    # because the kernel ships weights / runs the score matmul in bf16.
    q_ref = x @ wq.T + bq
    k_ref = x @ wk.T + bk
    v_ref = x @ wv.T + bv
    scores = jnp.einsum("bsd,btd->bst", q_ref, k_ref) / (D ** 0.5)
    ref = jnp.einsum("bst,btd->bsd", scores, v_ref)
    assert out.shape == (B, S, D)
    assert jnp.allclose(out, ref, atol=5e-2, rtol=5e-2), "mismatch vs reference"

    print("KERNEL_OK")
</pallas_src>

<mosaic_0001>
module attributes {stable_mosaic.version = 11 : i64} {
  func.func @_mha_kernel(%arg0: memref<2x8x32xf32, #tpu.memory_space<vmem>>, %arg1: memref<3x32x32xbf16, #tpu.memory_space<vmem>>, %arg2: memref<3x1x32xf32, #tpu.memory_space<vmem>>, %arg3: memref<2x8x32xf32, #tpu.memory_space<vmem>>) attributes {dimension_semantics = [], scalar_prefetch = 0 : i64, scratch_operands = 0 : i64, tpu.core_type = #tpu.core_type<tc>} {
    %c0 = arith.constant 0 : index
    %c0_0 = arith.constant 0 : index
    %c0_1 = arith.constant 0 : index
    %0 = vector.load %arg0[%c0, %c0_0, %c0_1] : memref<2x8x32xf32, #tpu.memory_space<vmem>>, vector<2x8x32xf32>
    %1 = vector.shape_cast %0 : vector<2x8x32xf32> to vector<16x32xf32>
    %2 = arith.truncf %1 : vector<16x32xf32> to vector<16x32xbf16>
    %c0_2 = arith.constant 0 : index
    %c0_3 = arith.constant 0 : index
    %c0_4 = arith.constant 0 : index
    %3 = vector.load %arg1[%c0_2, %c0_3, %c0_4] : memref<3x32x32xbf16, #tpu.memory_space<vmem>>, vector<1x32x32xbf16>
    %4 = vector.shape_cast %3 : vector<1x32x32xbf16> to vector<32x32xbf16>
    %cst = arith.constant dense<0.000000e+00> : vector<16x32xf32>
    %5 = tpu.matmul %2, %4, %cst {dimension_numbers = #tpu.dot_dimension_numbers<[1], [1], [0], [0], [0, 0, 1, 0], [], []>} : vector<16x32xbf16>, vector<32x32xbf16>, vector<16x32xf32> -> vector<16x32xf32>
    %c0_5 = arith.constant 0 : index
    %c0_6 = arith.constant 0 : index
    %c0_7 = arith.constant 0 : index
    %6 = vector.load %arg2[%c0_5, %c0_6, %c0_7] : memref<3x1x32xf32, #tpu.memory_space<vmem>>, vector<1x1x32xf32>
    %7 = vector.shape_cast %6 : vector<1x1x32xf32> to vector<1x32xf32>
    %8 = vector.broadcast %7 : vector<1x32xf32> to vector<16x32xf32>
    %9 = arith.addf %5, %8 : vector<16x32xf32>
    %10 = vector.shape_cast %9 : vector<16x32xf32> to vector<2x8x32xf32>
    %11 = arith.truncf %10 : vector<2x8x32xf32> to vector<2x8x32xbf16>
    %c1 = arith.constant 1 : index
    %c0_8 = arith.constant 0 : index
    %c0_9 = arith.constant 0 : index
    %12 = vector.load %arg1[%c1, %c0_8, %c0_9] : memref<3x32x32xbf16, #tpu.memory_space<vmem>>, vector<1x32x32xbf16>
    %13 = vector.shape_cast %12 : vector<1x32x32xbf16> to vector<32x32xbf16>
    %cst_10 = arith.constant dense<0.000000e+00> : vector<16x32xf32>
    %14 = tpu.matmul %2, %13, %cst_10 {dimension_numbers = #tpu.dot_dimension_numbers<[1], [1], [0], [0], [0, 0, 1, 0], [], []>} : vector<16x32xbf16>, vector<32x32xbf16>, vector<16x32xf32> -> vector<16x32xf32>
    %c1_11 = arith.constant 1 : index
    %c0_12 = arith.constant 0 : index
    %c0_13 = arith.constant 0 : index
    %15 = vector.load %arg2[%c1_11, %c0_12, %c0_13] : memref<3x1x32xf32, #tpu.memory_space<vmem>>, vector<1x1x32xf32>
    %16 = vector.shape_cast %15 : vector<1x1x32xf32> to vector<1x32xf32>
    %17 = vector.broadcast %16 : vector<1x32xf32> to vector<16x32xf32>
    %18 = arith.addf %14, %17 : vector<16x32xf32>
    %19 = vector.shape_cast %18 : vector<16x32xf32> to vector<2x8x32xf32>
    %20 = arith.truncf %19 : vector<2x8x32xf32> to vector<2x8x32xbf16>
    %c2 = arith.constant 2 : index
    %c0_14 = arith.constant 0 : index
    %c0_15 = arith.constant 0 : index
    %21 = vector.load %arg1[%c2, %c0_14, %c0_15] : memref<3x32x32xbf16, #tpu.memory_space<vmem>>, vector<1x32x32xbf16>
    %22 = vector.shape_cast %21 : vector<1x32x32xbf16> to vector<32x32xbf16>
    %cst_16 = arith.constant dense<0.000000e+00> : vector<16x32xf32>
    %23 = tpu.matmul %2, %22, %cst_16 {dimension_numbers = #tpu.dot_dimension_numbers<[1], [1], [0], [0], [0, 0, 1, 0], [], []>} : vector<16x32xbf16>, vector<32x32xbf16>, vector<16x32xf32> -> vector<16x32xf32>
    %c2_17 = arith.constant 2 : index
    %c0_18 = arith.constant 0 : index
    %c0_19 = arith.constant 0 : index
    %24 = vector.load %arg2[%c2_17, %c0_18, %c0_19] : memref<3x1x32xf32, #tpu.memory_space<vmem>>, vector<1x1x32xf32>
    %25 = vector.shape_cast %24 : vector<1x1x32xf32> to vector<1x32xf32>
    %26 = vector.broadcast %25 : vector<1x32xf32> to vector<16x32xf32>
    %27 = arith.addf %23, %26 : vector<16x32xf32>
    %28 = vector.shape_cast %27 : vector<16x32xf32> to vector<2x8x32xf32>
    "tpu.trace_start"() <{level = 10 : i32, message = "bsd,btd->bst"}> : () -> ()
    %cst_20 = arith.constant dense<0.000000e+00> : vector<2x8x8xf32>
    %29 = tpu.matmul %11, %20, %cst_20 {dimension_numbers = #tpu.dot_dimension_numbers<[2], [2], [1], [1], [0, 0, 0, 1, 1, 1], [0], [0]>} : vector<2x8x32xbf16>, vector<2x8x32xbf16>, vector<2x8x8xf32> -> vector<2x8x8xf32>
    "tpu.trace_stop"() : () -> ()
    "tpu.trace_start"() <{level = 10 : i32, message = "bst,btd->bsd"}> : () -> ()
    %cst_21 = arith.constant dense<0.000000e+00> : vector<2x8x32xf32>
    %30 = tpu.matmul %29, %28, %cst_21 {dimension_numbers = #tpu.dot_dimension_numbers<[2], [1], [1], [2], [0, 0, 0, 1, 1, 2], [0], [0]>} : vector<2x8x8xf32>, vector<2x8x32xf32>, vector<2x8x32xf32> -> vector<2x8x32xf32>
    "tpu.trace_stop"() : () -> ()
    %c0_22 = arith.constant 0 : index
    %c0_23 = arith.constant 0 : index
    %c0_24 = arith.constant 0 : index
    %31 = vector.load %arg3[%c0_22, %c0_23, %c0_24] : memref<2x8x32xf32, #tpu.memory_space<vmem>>, vector<2x8x32xf32>
    tpu.vector_store %arg3[%c0_22, %c0_23, %c0_24], %30 {strides = array<i32>} : memref<2x8x32xf32, #tpu.memory_space<vmem>>, vector<2x8x32xf32>,
    return
  }
}

</mosaic_0001>

<llo_original>
// kernel: mh_attention.1
$region0: #{mh_attention.1}
  #allocation0 [shape = 'u32[]', space=smem, size = 0x4, offset = 0x4, fixed_abs, tag = 'smem constant byte address 0x4 - core index']
  #allocation1 [shape = 'u32[144,128]{1,0:T(1,128)}', space=vmem, size = 0x12000, scoped, tag = 'internal scratch']
  %s0 = inlined_call_operand.hbm [shape: f32[2,8,32], index: 0, kind: input, shape index: {}]
  %s1 = inlined_call_operand.hbm [shape: bf16[3,32,32], index: 1, kind: input, shape index: {}]
  %s2 = inlined_call_operand.vmem [shape: f32[3,1,32], index: 2, kind: input, shape index: {}]
  %s3 = inlined_call_operand.hbm [shape: f32[2,8,32], index: 3, kind: output, shape index: {}]
  %s4 = sld [smem:[#allocation0]]
  $region30: #{mh_attention.1} parent=0
    _
  %s6 = ssub.s32 1, %s4
  %s7 = scalar_select 0, %s6, %s4
  $region1: #{mh_attention.1} parent=0
    #allocation2 [shape = 'u8[8192]{0}', space=vmem, size = 0x2000, scoped, tag = 'input window, operand 0, single buffered']
    #allocation3 [shape = 's32[1]{0}', space=sflag, size = 0x4, scoped, tag = 'scoped memory for mh_attention.1']
    #allocation4 [shape = 's32[1]{0}', space=sflag, size = 0x4, scoped, tag = 'scoped memory for mh_attention.1']
    #allocation5 [shape = 'u8[24576]{0}', space=vmem, size = 0x6000, scoped, tag = 'input window, operand 1, single buffered']
    #allocation6 [shape = 's32[1]{0}', space=sflag, size = 0x4, scoped, tag = 'scoped memory for mh_attention.1']
    #allocation7 [shape = 'u8[8192]{0}', space=vmem, size = 0x2000, scoped, tag = 'output window, operand 0, single buffered']
    %8 = vsyncpa [#allocation3], 0
    %9 = vsyncpa [#allocation6], 0
    %10 = vsyncpa [#allocation4], 0
    // Predicated region
    $region2: #{mh_attention.1} parent=1 // pred_check
      _
    $region3: #{mh_attention.1} parent=1 // pred_check_branch
      %12 = sbr.rel (0) target = $region5
    $region4: #{mh_attention.1} parent=1 // pred_region
      %s14 = ssub.s32 256, 256
      %15 = vsyncadd [#allocation3], %s14
      %s16 = sshll.u32 [#allocation2], 4
      %s17 = int_to_ptr.vmem [resolvable:$true] %s16
      %22 = dma.hbm_to_vmem [thread:$0]  %s0, 256, %s17, [#allocation3], 128, 128, 8
    $region5: #{mh_attention.1} parent=1 // pred_fallthru
      _
    // Predicated region
    $region6: #{mh_attention.1} parent=1 // pred_check
      _
    $region7: #{mh_attention.1} parent=1 // pred_check_branch
      %24 = sbr.rel (0) target = $region9
    $region8: #{mh_attention.1} parent=1 // pred_region
      %s26 = ssub.s32 768, 768
      %27 = vsyncadd [#allocation6], %s26
      %s28 = sshll.u32 [#allocation5], 4
      %s29 = int_to_ptr.vmem [resolvable:$true] %s28
      %34 = dma.hbm_to_vmem [thread:$0]  %s1, 768, %s29, [#allocation6], 64, 64, 4
    $region9: #{mh_attention.1} parent=1 // pred_fallthru
      _
    // Predicated region
    $region10: #{mh_attention.1} parent=1 // pred_check
      _
    $region11: #{mh_attention.1} parent=1 // pred_check_branch
      %36 = sbr.rel (0) target = $region13
    $region12: #{mh_attention.1} parent=1 // pred_region
      _
    $region13: #{mh_attention.1} parent=1 // pred_fallthru
      _
    // Predicated region
    $region14: #{mh_attention.1} parent=1 // pred_check
      _
    $region15: #{mh_attention.1} parent=1 // pred_check_branch
      %38 = sbr.rel (0) target = $region17
    $region16: #{mh_attention.1} parent=1 // pred_region
      %39 = dma.done [#allocation3], 256
    $region17: #{mh_attention.1} parent=1 // pred_fallthru
      _
    // Predicated region
    $region18: #{mh_attention.1} parent=1 // pred_check
      _
    $region19: #{mh_attention.1} parent=1 // pred_check_branch
      %41 = sbr.rel (0) target = $region21
    $region20: #{mh_attention.1} parent=1 // pred_region
      %42 = dma.done [#allocation6], 768
    $region21: #{mh_attention.1} parent=1 // pred_fallthru
      _
    %v44 = vld [vmem:[#allocation2] sm:$0xff]
    %v45 = vld [vmem:[#allocation2 + $0x8] sm:$0xff]
    %v46 = vpack.c.bf16 %v45, %v44
    %v47 = vld [vmem:[#allocation5] sm:$0xf]
    %v48 = vld [vmem:[#allocation5 + $0x4] sm:$0xf]
    %v49 = vld [vmem:[#allocation5 + $0x8] sm:$0xf]
    %v50 = vld [vmem:[#allocation5 + $0xc] sm:$0xf]
    %v51 = vld [vmem:[%s2] sm:$0x1]
    %v53 = vlaneseq
    %v54 = vshrl.u32 %v53, 7
    %v55 = vsub.s32 0, %v54
    %v56 = vrot.slane %v51, %v55
    %v62 = vunpack.c.l.b16 %v47
    %v63 = vunpack.c.l.b16 %v48
    %v64 = vunpack.c.l.b16 %v49
    %v65 = vunpack.c.l.b16 %v50
    %v66 = vpack.c.b16 %v63, %v62
    %v67 = vpack.c.b16 %v65, %v64
    %vm68 = vcmask 261120
    %v70 = vsel %vm68, %v46, 0
    %v73 = vsel %vm68, %v66, 0
    %v76 = vsel %vm68, %v67, 0
    %78 = vmatprep.subr.bf16.mxu0 0
    %79 = vmatpush1.bf16.xpose.msra.mxu0 %v73
    %80 = vmatprep.subr.bf16.mxu0 0
    %81 = vmatpush1.bf16.xpose.msra.mxu0 %v76
    %82 = vmatprep.subr.bf16.mxu0 0
    %83 = vmatpush1.bf16.xpose.msra.mxu0 0
    %84 = vmatprep.subr.bf16.mxu0 0
    %85 = vmatpush1.bf16.xpose.msra.mxu0 0
    %86 = vmatprep.subr.bf16.mxu0 0
    %87 = vmatpush1.bf16.xpose.msra.mxu0 0
    %88 = vmatprep.subr.bf16.mxu0 0
    %89 = vmatpush1.bf16.xpose.msra.mxu0 0
    %90 = vmatprep.subr.bf16.mxu0 0
    %91 = vmatpush1.bf16.xpose.msra.mxu0 0
    %92 = vmatprep.subr.bf16.mxu0 0
    %93 = vmatpush1.bf16.xpose.msra.mxu0 0
    %94 = vmatprep.subr.bf16.mxu0 0
    %95 = vmatpush1.bf16.xpose.msra.mxu0 0
    %96 = vmatprep.subr.bf16.mxu0 0
    %97 = vmatpush1.bf16.xpose.msra.mxu0 0
    %98 = vmatprep.subr.bf16.mxu0 0
    %99 = vmatpush1.bf16.xpose.msra.mxu0 0
    %100 = vmatprep.subr.bf16.mxu0 0
    %101 = vmatpush1.bf16.xpose.msra.mxu0 0
    %102 = vmatprep.subr.bf16.mxu0 0
    %103 = vmatpush1.bf16.xpose.msra.mxu0 0
    %104 = vmatprep.subr.bf16.mxu0 0
    %105 = vmatpush1.bf16.xpose.msra.mxu0 0
    %106 = vmatprep.subr.bf16.mxu0 0
    %107 = vmatpush1.bf16.xpose.msra.mxu0 0
    %108 = vmatprep.subr.bf16.mxu0 0
    %109 = vmatpush1.bf16.xpose.msra.mxu0 0
    %110 = vmatprep.mubr.bf16.mxu0 0
    %111 = vmatmul.mubr.bf16.gmra.mrb[0].mxu0 %v70
    %v112 = vpop.f32.mrb[0].mxu0
    %v113 = vadd.f32 %v56, %v112
    %v114 = vpop.f32.mrb[0].mxu0
    %v115 = vpop.f32.mrb[0].mxu0
    %v116 = vadd.f32 %v56, %v115
    %v117 = vpop.f32.mrb[0].mxu0
    %118 = vdwg.mxu0
    %v119 = vpack.c.bf16 %v113, %v113
    %v120 = vpack.c.bf16 %v116, %v116
    %s121 = scalar_lea.vmem [#allocation5], 16
    %v122 = vld [vmem:[%s121] sm:$0xf]
    %v123 = vld [vmem:[%s121 + $0x4] sm:$0xf]
    %v124 = vld [vmem:[%s121 + $0x8] sm:$0xf]
    %v125 = vld [vmem:[%s121 + $0xc] sm:$0xf]
    %s126 = scalar_lea.vmem %s2, 1
    %v127 = vld [vmem:[%s126] sm:$0x1]
    %v129 = vlaneseq
    %v130 = vshrl.u32 %v129, 7
    %v131 = vsub.s32 0, %v130
    %v132 = vrot.slane %v127, %v131
    %v138 = vunpack.c.l.b16 %v122
    %v139 = vunpack.c.l.b16 %v123
    %v140 = vunpack.c.l.b16 %v124
    %v141 = vunpack.c.l.b16 %v125
    %v142 = vpack.c.b16 %v139, %v138
    %v143 = vpack.c.b16 %v141, %v140
    %v145 = vsel %vm68, %v142, 0
    %v148 = vsel %vm68, %v143, 0
    %150 = vmatprep.subr.bf16.mxu0 0
    %151 = vmatpush1.bf16.xpose.msra.mxu0 %v145
    %152 = vmatprep.subr.bf16.mxu0 0
    %153 = vmatpush1.bf16.xpose.msra.mxu0 %v148
    %154 = vmatprep.subr.bf16.mxu0 0
    %155 = vmatpush1.bf16.xpose.msra.mxu0 0
    %156 = vmatprep.subr.bf16.mxu0 0
    %157 = vmatpush1.bf16.xpose.msra.mxu0 0
    %158 = vmatprep.subr.bf16.mxu0 0
    %159 = vmatpush1.bf16.xpose.msra.mxu0 0
    %160 = vmatprep.subr.bf16.mxu0 0
    %161 = vmatpush1.bf16.xpose.msra.mxu0 0
    %162 = vmatprep.subr.bf16.mxu0 0
    %163 = vmatpush1.bf16.xpose.msra.mxu0 0
    %164 = vmatprep.subr.bf16.mxu0 0
    %165 = vmatpush1.bf16.xpose.msra.mxu0 0
    %166 = vmatprep.subr.bf16.mxu0 0
    %167 = vmatpush1.bf16.xpose.msra.mxu0 0
    %168 = vmatprep.subr.bf16.mxu0 0
    %169 = vmatpush1.bf16.xpose.msra.mxu0 0
    %170 = vmatprep.subr.bf16.mxu0 0
    %171 = vmatpush1.bf16.xpose.msra.mxu0 0
    %172 = vmatprep.subr.bf16.mxu0 0
    %173 = vmatpush1.bf16.xpose.msra.mxu0 0
    %174 = vmatprep.subr.bf16.mxu0 0
    %175 = vmatpush1.bf16.xpose.msra.mxu0 0
    %176 = vmatprep.subr.bf16.mxu0 0
    %177 = vmatpush1.bf16.xpose.msra.mxu0 0
    %178 = vmatprep.subr.bf16.mxu0 0
    %179 = vmatpush1.bf16.xpose.msra.mxu0 0
    %180 = vmatprep.subr.bf16.mxu0 0
    %181 = vmatpush1.bf16.xpose.msra.mxu0 0
    %182 = vmatprep.mubr.bf16.mxu0 0
    %183 = vmatmul.mubr.bf16.gmra.mrb[0].mxu0 %v70
    %v184 = vpop.f32.mrb[0].mxu0
    %v185 = vadd.f32 %v132, %v184
    %v186 = vpop.f32.mrb[0].mxu0
    %v187 = vpop.f32.mrb[0].mxu0
    %v188 = vadd.f32 %v132, %v187
    %v189 = vpop.f32.mrb[0].mxu0
    %190 = vdwg.mxu0
    %v191 = vpack.c.bf16 %v185, %v185
    %v192 = vpack.c.bf16 %v188, %v188
    %s193 = scalar_lea.vmem [#allocation5], 32
    %v194 = vld [vmem:[%s193] sm:$0xf]
    %v195 = vld [vmem:[%s193 + $0x4] sm:$0xf]
    %v196 = vld [vmem:[%s193 + $0x8] sm:$0xf]
    %v197 = vld [vmem:[%s193 + $0xc] sm:$0xf]
    %s198 = scalar_lea.vmem %s2, 2
    %v199 = vld [vmem:[%s198] sm:$0x1]
    %v201 = vlaneseq
    %v202 = vshrl.u32 %v201, 7
    %v203 = vsub.s32 0, %v202
    %v204 = vrot.slane %v199, %v203
    %v210 = vunpack.c.l.b16 %v194
    %v211 = vunpack.c.l.b16 %v195
    %v212 = vunpack.c.l.b16 %v196
    %v213 = vunpack.c.l.b16 %v197
    %v214 = vpack.c.b16 %v211, %v210
    %v215 = vpack.c.b16 %v213, %v212
    %v217 = vsel %vm68, %v214, 0
    %v220 = vsel %vm68, %v215, 0
    %222 = vmatprep.subr.bf16.mxu0 0
    %223 = vmatpush1.bf16.xpose.msra.mxu0 %v217
    %224 = vmatprep.subr.bf16.mxu0 0
    %225 = vmatpush1.bf16.xpose.msra.mxu0 %v220
    %226 = vmatprep.subr.bf16.mxu0 0
    %227 = vmatpush1.bf16.xpose.msra.mxu0 0
    %228 = vmatprep.subr.bf16.mxu0 0
    %229 = vmatpush1.bf16.xpose.msra.mxu0 0
    %230 = vmatprep.subr.bf16.mxu0 0
    %231 = vmatpush1.bf16.xpose.msra.mxu0 0
    %232 = vmatprep.subr.bf16.mxu0 0
    %233 = vmatpush1.bf16.xpose.msra.mxu0 0
    %234 = vmatprep.subr.bf16.mxu0 0
    %235 = vmatpush1.bf16.xpose.msra.mxu0 0
    %236 = vmatprep.subr.bf16.mxu0 0
    %237 = vmatpush1.bf16.xpose.msra.mxu0 0
    %238 = vmatprep.subr.bf16.mxu0 0
    %239 = vmatpush1.bf16.xpose.msra.mxu0 0
    %240 = vmatprep.subr.bf16.mxu0 0
    %241 = vmatpush1.bf16.xpose.msra.mxu0 0
    %242 = vmatprep.subr.bf16.mxu0 0
    %243 = vmatpush1.bf16.xpose.msra.mxu0 0
    %244 = vmatprep.subr.bf16.mxu0 0
    %245 = vmatpush1.bf16.xpose.msra.mxu0 0
    %246 = vmatprep.subr.bf16.mxu0 0
    %247 = vmatpush1.bf16.xpose.msra.mxu0 0
    %248 = vmatprep.subr.bf16.mxu0 0
    %249 = vmatpush1.bf16.xpose.msra.mxu0 0
    %250 = vmatprep.subr.bf16.mxu0 0
    %251 = vmatpush1.bf16.xpose.msra.mxu0 0
    %252 = vmatprep.subr.bf16.mxu0 0
    %253 = vmatpush1.bf16.xpose.msra.mxu0 0
    %254 = vmatprep.mubr.bf16.mxu0 0
    %255 = vmatmul.mubr.bf16.gmra.mrb[0].mxu0 %v70
    %v256 = vpop.f32.mrb[0].mxu0
    %v257 = vadd.f32 %v204, %v256
    %v258 = vpop.f32.mrb[0].mxu0
    %v259 = vpop.f32.mrb[0].mxu0
    %v260 = vadd.f32 %v204, %v259
    %v261 = vpop.f32.mrb[0].mxu0
    %262 = vdwg.mxu0
    %v264 = vsel %vm68, %v119, 0
    %v267 = vsel %vm68, %v191, 0
    %269 = vmatprep.subr.bf16.mxu0 0
    %270 = vmatpush1.bf16.xpose.msra.mxu0 %v267
    %271 = vmatprep.subr.bf16.mxu0 0
    %272 = vmatpush1.bf16.xpose.msra.mxu0 0
    %273 = vmatprep.subr.bf16.mxu0 0
    %274 = vmatpush1.bf16.xpose.msra.mxu0 0
    %275 = vmatprep.subr.bf16.mxu0 0
    %276 = vmatpush1.bf16.xpose.msra.mxu0 0
    %277 = vmatprep.subr.bf16.mxu0 0
    %278 = vmatpush1.bf16.xpose.msra.mxu0 0
    %279 = vmatprep.subr.bf16.mxu0 0
    %280 = vmatpush1.bf16.xpose.msra.mxu0 0
    %281 = vmatprep.subr.bf16.mxu0 0
    %282 = vmatpush1.bf16.xpose.msra.mxu0 0
    %283 = vmatprep.subr.bf16.mxu0 0
    %284 = vmatpush1.bf16.xpose.msra.mxu0 0
    %285 = vmatprep.subr.bf16.mxu0 0
    %286 = vmatpush1.bf16.xpose.msra.mxu0 0
    %287 = vmatprep.subr.bf16.mxu0 0
    %288 = vmatpush1.bf16.xpose.msra.mxu0 0
    %289 = vmatprep.subr.bf16.mxu0 0
    %290 = vmatpush1.bf16.xpose.msra.mxu0 0
    %291 = vmatprep.subr.bf16.mxu0 0
    %292 = vmatpush1.bf16.xpose.msra.mxu0 0
    %293 = vmatprep.subr.bf16.mxu0 0
    %294 = vmatpush1.bf16.xpose.msra.mxu0 0
    %295 = vmatprep.subr.bf16.mxu0 0
    %296 = vmatpush1.bf16.xpose.msra.mxu0 0
    %297 = vmatprep.subr.bf16.mxu0 0
    %298 = vmatpush1.bf16.xpose.msra.mxu0 0
    %299 = vmatprep.subr.bf16.mxu0 0
    %300 = vmatpush1.bf16.xpose.msra.mxu0 0
    %301 = vmatprep.mubr.bf16.mxu0 0
    %302 = vmatmul.mubr.bf16.gmra.mrb[0].mxu0 %v264
    %v303 = vpop.f32.mrb[0].mxu0
    %v304 = vadd.f32 0.0, %v303
    %v305 = vpop.f32.mrb[0].mxu0
    %v306 = vpop.f32.mrb[0].mxu0
    %v307 = vpop.f32.mrb[0].mxu0
    %308 = vdwg.mxu0
    %v310 = vsel %vm68, %v120, 0
    %v313 = vsel %vm68, %v192, 0
    %315 = vmatprep.subr.bf16.mxu0 0
    %316 = vmatpush1.bf16.xpose.msra.mxu0 %v313
    %317 = vmatprep.subr.bf16.mxu0 0
    %318 = vmatpush1.bf16.xpose.msra.mxu0 0
    %319 = vmatprep.subr.bf16.mxu0 0
    %320 = vmatpush1.bf16.xpose.msra.mxu0 0
    %321 = vmatprep.subr.bf16.mxu0 0
    %322 = vmatpush1.bf16.xpose.msra.mxu0 0
    %323 = vmatprep.subr.bf16.mxu0 0
    %324 = vmatpush1.bf16.xpose.msra.mxu0 0
    %325 = vmatprep.subr.bf16.mxu0 0
    %326 = vmatpush1.bf16.xpose.msra.mxu0 0
    %327 = vmatprep.subr.bf16.mxu0 0
    %328 = vmatpush1.bf16.xpose.msra.mxu0 0
    %329 = vmatprep.subr.bf16.mxu0 0
    %330 = vmatpush1.bf16.xpose.msra.mxu0 0
    %331 = vmatprep.subr.bf16.mxu0 0
    %332 = vmatpush1.bf16.xpose.msra.mxu0 0
    %333 = vmatprep.subr.bf16.mxu0 0
    %334 = vmatpush1.bf16.xpose.msra.mxu0 0
    %335 = vmatprep.subr.bf16.mxu0 0
    %336 = vmatpush1.bf16.xpose.msra.mxu0 0
    %337 = vmatprep.subr.bf16.mxu0 0
    %338 = vmatpush1.bf16.xpose.msra.mxu0 0
    %339 = vmatprep.subr.bf16.mxu0 0
    %340 = vmatpush1.bf16.xpose.msra.mxu0 0
    %341 = vmatprep.subr.bf16.mxu0 0
    %342 = vmatpush1.bf16.xpose.msra.mxu0 0
    %343 = vmatprep.subr.bf16.mxu0 0
    %344 = vmatpush1.bf16.xpose.msra.mxu0 0
    %345 = vmatprep.subr.bf16.mxu0 0
    %346 = vmatpush1.bf16.xpose.msra.mxu0 0
    %347 = vmatprep.mubr.bf16.mxu0 0
    %348 = vmatmul.mubr.bf16.gmra.mrb[0].mxu0 %v310
    %v349 = vpop.f32.mrb[0].mxu0
    %v350 = vadd.f32 0.0, %v349
    %v351 = vpop.f32.mrb[0].mxu0
    %v352 = vpop.f32.mrb[0].mxu0
    %v353 = vpop.f32.mrb[0].mxu0
    %354 = vdwg.mxu0
    %vm355 = vcmask 64512
    %v357 = vsel %vm355, %v304, 0
    %359 = vmatprep.subr.mxu0 0.0
    %360 = vmatpush1.msra.mxu0 %v257
    %361 = vmatprep.subr.mxu0 0.0
    %362 = vmatpush1.msra.mxu0 0.0
    %363 = vmatprep.subr.mxu0 0.0
    %364 = vmatpush1.msra.mxu0 0.0
    %365 = vmatprep.subr.mxu0 0.0
    %366 = vmatpush1.msra.mxu0 0.0
    %367 = vmatprep.subr.mxu0 0.0
    %368 = vmatpush1.msra.mxu0 0.0
    %369 = vmatprep.subr.mxu0 0.0
    %370 = vmatpush1.msra.mxu0 0.0
    %371 = vmatprep.subr.mxu0 0.0
    %372 = vmatpush1.msra.mxu0 0.0
    %373 = vmatprep.subr.mxu0 0.0
    %374 = vmatpush1.msra.mxu0 0.0
    %375 = vmatprep.subr.mxu0 0.0
    %376 = vmatpush1.msra.mxu0 0.0
    %377 = vmatprep.subr.mxu0 0.0
    %378 = vmatpush1.msra.mxu0 0.0
    %379 = vmatprep.subr.mxu0 0.0
    %380 = vmatpush1.msra.mxu0 0.0
    %381 = vmatprep.subr.mxu0 0.0
    %382 = vmatpush1.msra.mxu0 0.0
    %383 = vmatprep.subr.mxu0 0.0
    %384 = vmatpush1.msra.mxu0 0.0
    %385 = vmatprep.subr.mxu0 0.0
    %386 = vmatpush1.msra.mxu0 0.0
    %387 = vmatprep.subr.mxu0 0.0
    %388 = vmatpush1.msra.mxu0 0.0
    %389 = vmatprep.subr.mxu0 0.0
    %390 = vmatpush1.msra.mxu0 0.0
    %391 = vmatprep.subr.mxu0 0.0
    %392 = vmatpush1.msra.mxu0 0.0
    %393 = vmatprep.subr.mxu0 0.0
    %394 = vmatpush1.msra.mxu0 0.0
    %395 = vmatprep.subr.mxu0 0.0
    %396 = vmatpush1.msra.mxu0 0.0
    %397 = vmatprep.subr.mxu0 0.0
    %398 = vmatpush1.msra.mxu0 0.0
    %399 = vmatprep.subr.mxu0 0.0
    %400 = vmatpush1.msra.mxu0 0.0
    %401 = vmatprep.subr.mxu0 0.0
    %402 = vmatpush1.msra.mxu0 0.0
    %403 = vmatprep.subr.mxu0 0.0
    %404 = vmatpush1.msra.mxu0 0.0
    %405 = vmatprep.subr.mxu0 0.0
    %406 = vmatpush1.msra.mxu0 0.0
    %407 = vmatprep.subr.mxu0 0.0
    %408 = vmatpush1.msra.mxu0 0.0
    %409 = vmatprep.subr.mxu0 0.0
    %410 = vmatpush1.msra.mxu0 0.0
    %411 = vmatprep.subr.mxu0 0.0
    %412 = vmatpush1.msra.mxu0 0.0
    %413 = vmatprep.subr.mxu0 0.0
    %414 = vmatpush1.msra.mxu0 0.0
    %415 = vmatprep.subr.mxu0 0.0
    %416 = vmatpush1.msra.mxu0 0.0
    %417 = vmatprep.subr.mxu0 0.0
    %418 = vmatpush1.msra.mxu0 0.0
    %419 = vmatprep.subr.mxu0 0.0
    %420 = vmatpush1.msra.mxu0 0.0
    %421 = vmatprep.subr.mxu0 0.0
    %422 = vmatpush1.msra.mxu0 0.0
    %423 = vmatprep.mubr.f32.mxu0 0.0
    %424 = vmatmul.mubr.f32.gmra.mrb[0].mxu0 %v357
    %v425 = vpop.f32.mrb[0].mxu0
    %v426 = vadd.f32 0.0, %v425
    %v427 = vpop.f32.mrb[0].mxu0
    %428 = vdwg.mxu0
    %v430 = vsel %vm355, %v350, 0
    %432 = vmatprep.subr.mxu0 0.0
    %433 = vmatpush1.msra.mxu0 %v260
    %434 = vmatprep.subr.mxu0 0.0
    %435 = vmatpush1.msra.mxu0 0.0
    %436 = vmatprep.subr.mxu0 0.0
    %437 = vmatpush1.msra.mxu0 0.0
    %438 = vmatprep.subr.mxu0 0.0
    %439 = vmatpush1.msra.mxu0 0.0
    %440 = vmatprep.subr.mxu0 0.0
    %441 = vmatpush1.msra.mxu0 0.0
    %442 = vmatprep.subr.mxu0 0.0
    %443 = vmatpush1.msra.mxu0 0.0
    %444 = vmatprep.subr.mxu0 0.0
    %445 = vmatpush1.msra.mxu0 0.0
    %446 = vmatprep.subr.mxu0 0.0
    %447 = vmatpush1.msra.mxu0 0.0
    %448 = vmatprep.subr.mxu0 0.0
    %449 = vmatpush1.msra.mxu0 0.0
    %450 = vmatprep.subr.mxu0 0.0
    %451 = vmatpush1.msra.mxu0 0.0
    %452 = vmatprep.subr.mxu0 0.0
    %453 = vmatpush1.msra.mxu0 0.0
    %454 = vmatprep.subr.mxu0 0.0
    %455 = vmatpush1.msra.mxu0 0.0
    %456 = vmatprep.subr.mxu0 0.0
    %457 = vmatpush1.msra.mxu0 0.0
    %458 = vmatprep.subr.mxu0 0.0
    %459 = vmatpush1.msra.mxu0 0.0
    %460 = vmatprep.subr.mxu0 0.0
    %461 = vmatpush1.msra.mxu0 0.0
    %462 = vmatprep.subr.mxu0 0.0
    %463 = vmatpush1.msra.mxu0 0.0
    %464 = vmatprep.subr.mxu0 0.0
    %465 = vmatpush1.msra.mxu0 0.0
    %466 = vmatprep.subr.mxu0 0.0
    %467 = vmatpush1.msra.mxu0 0.0
    %468 = vmatprep.subr.mxu0 0.0
    %469 = vmatpush1.msra.mxu0 0.0
    %470 = vmatprep.subr.mxu0 0.0
    %471 = vmatpush1.msra.mxu0 0.0
    %472 = vmatprep.subr.mxu0 0.0
    %473 = vmatpush1.msra.mxu0 0.0
    %474 = vmatprep.subr.mxu0 0.0
    %475 = vmatpush1.msra.mxu0 0.0
    %476 = vmatprep.subr.mxu0 0.0
    %477 = vmatpush1.msra.mxu0 0.0
    %478 = vmatprep.subr.mxu0 0.0
    %479 = vmatpush1.msra.mxu0 0.0
    %480 = vmatprep.subr.mxu0 0.0
    %481 = vmatpush1.msra.mxu0 0.0
    %482 = vmatprep.subr.mxu0 0.0
    %483 = vmatpush1.msra.mxu0 0.0
    %484 = vmatprep.subr.mxu0 0.0
    %485 = vmatpush1.msra.mxu0 0.0
    %486 = vmatprep.subr.mxu0 0.0
    %487 = vmatpush1.msra.mxu0 0.0
    %488 = vmatprep.subr.mxu0 0.0
    %489 = vmatpush1.msra.mxu0 0.0
    %490 = vmatprep.subr.mxu0 0.0
    %491 = vmatpush1.msra.mxu0 0.0
    %492 = vmatprep.subr.mxu0 0.0
    %493 = vmatpush1.msra.mxu0 0.0
    %494 = vmatprep.subr.mxu0 0.0
    %495 = vmatpush1.msra.mxu0 0.0
    %496 = vmatprep.mubr.f32.mxu0 0.0
    %497 = vmatmul.mubr.f32.gmra.mrb[0].mxu0 %v430
    %v498 = vpop.f32.mrb[0].mxu0
    %v499 = vadd.f32 0.0, %v498
    %v500 = vpop.f32.mrb[0].mxu0
    %501 = vdwg.mxu0
    %502 = vst.msk [vmem:[#allocation7] sm:$0xff] %vm68, %v426
    %503 = vst.msk [vmem:[#allocation7 + $0x8] sm:$0xff] %vm68, %v499
    // Predicated region
    $region22: #{mh_attention.1} parent=1 // pred_check
      _
    $region23: #{mh_attention.1} parent=1 // pred_check_branch
      %505 = sbr.rel (0) target = $region25
    $region24: #{mh_attention.1} parent=1 // pred_region
      %s507 = ssub.s32 256, 256
      %508 = vsyncadd [#allocation4], %s507
      %s509 = sshll.u32 [#allocation7], 4
      %s510 = int_to_ptr.vmem [resolvable:$true] %s509
      %515 = dma.vmem_to_hbm [thread:$0]  %s510, 256, %s3, [#allocation4], 128, 128, 8
    $region25: #{mh_attention.1} parent=1 // pred_fallthru
      _
    // Predicated region
    $region26: #{mh_attention.1} parent=1 // pred_check
      _
    $region27: #{mh_attention.1} parent=1 // pred_check_branch
      %517 = sbr.rel (0) target = $region29
    $region28: #{mh_attention.1} parent=1 // pred_region
      %518 = dma.done [#allocation4], 256
    $region29: #{mh_attention.1} parent=1 // pred_fallthru
      _
    %519 = vsyncpa [#allocation3], 1
    %520 = vsyncpa [#allocation6], 1
    %521 = vsyncpa [#allocation4], 1

</llo_original>
